<compile_context>
chip_gen: v6e
topology: v6e:2x2x1
jax: 0.10.0
libtpu: 0.0.40
codegen_flags: <defaults>
</compile_context>

<pallas_src>
import functools

import jax
import jax.numpy as jnp
import numpy as np
from jax.experimental import pallas as pl
from jax.experimental.pallas import tpu as pltpu


def _round_up(x, m):
    return ((x + m - 1) // m) * m


_VMEM_LIMIT = 48 * 1024 * 1024  # leaves headroom below v7x's 64 MiB physical VMEM


# ----------------------------------------------------------------------------
# Kernel 1: tiled linear layer  (x @ W + b), f32 accumulation in VMEM scratch
# ----------------------------------------------------------------------------
def _linear_kernel(x_ref, w_ref, b_ref, o_ref, acc_ref):
    k = pl.program_id(2)

    @pl.when(k == 0)
    def _():
        acc_ref[...] = jnp.zeros_like(acc_ref)

    acc_ref[...] += jnp.dot(x_ref[...], w_ref[...],
                            preferred_element_type=jnp.float32)

    @pl.when(k == pl.num_programs(2) - 1)
    def _():
        o_ref[...] = (acc_ref[...] + b_ref[...].astype(jnp.float32)).astype(o_ref.dtype)


def pallas_linear(x, w, b, *, tm=256, tn=256, tk=512):
    """x: [M, K], w: [K, N], b: [N] -> [M, N]  (tiled MXU matmul + bias)."""
    M, K = x.shape
    N = w.shape[1]
    tm = min(tm, _round_up(M, 8))
    tn = min(tn, _round_up(N, 128))
    tk = min(tk, _round_up(K, 128))
    Mp, Kp, Np = _round_up(M, tm), _round_up(K, tk), _round_up(N, tn)

    if (Mp, Kp) != (M, K):
        x = jnp.pad(x, ((0, Mp - M), (0, Kp - K)))
    if (Kp, Np) != (K, N):
        w = jnp.pad(w, ((0, Kp - K), (0, Np - N)))
    b2 = b.reshape(1, N)
    if Np != N:
        b2 = jnp.pad(b2, ((0, 0), (0, Np - N)))

    out = pl.pallas_call(
        _linear_kernel,
        out_shape=jax.ShapeDtypeStruct((Mp, Np), x.dtype),
        grid=(Mp // tm, Np // tn, Kp // tk),
        in_specs=[
            pl.BlockSpec((tm, tk), lambda i, j, k: (i, k)),
            pl.BlockSpec((tk, tn), lambda i, j, k: (k, j)),
            pl.BlockSpec((1, tn), lambda i, j, k: (0, j)),
        ],
        out_specs=pl.BlockSpec((tm, tn), lambda i, j, k: (i, j)),
        scratch_shapes=[pltpu.VMEM((tm, tn), jnp.float32)],
        compiler_params=pltpu.CompilerParams(
            dimension_semantics=("parallel", "parallel", "arbitrary"),
            vmem_limit_bytes=_VMEM_LIMIT),
    )(x, w, b2)
    if (Mp, Np) != (M, N):
        out = out[:M, :N]
    return out


# ----------------------------------------------------------------------------
# Kernel 2: rotary embedding on the contiguous q|k slab [S, n_chunks*head_dim]
#           (rotate-half convention; cos/sin broadcast per chunk in-register)
# ----------------------------------------------------------------------------
def _rope_slab_kernel(x_ref, cos_ref, sin_ref, o_ref, *, n_chunks, head_dim):
    half = head_dim // 2
    cos = cos_ref[...].astype(jnp.float32)      # [tq, half]
    sin = sin_ref[...].astype(jnp.float32)
    x = x_ref[...]                               # [tq, n_chunks*head_dim]
    pieces = []
    for h in range(n_chunks):
        c = x[:, h * head_dim:(h + 1) * head_dim].astype(jnp.float32)
        x1 = c[:, :half]
        x2 = c[:, half:]
        pieces.append(x1 * cos - x2 * sin)
        pieces.append(x2 * cos + x1 * sin)
    o_ref[...] = jnp.concatenate(pieces, axis=-1).astype(o_ref.dtype)


def pallas_rope_slab(x, cos, sin, *, n_chunks, head_dim, tq=256):
    """x: [S, n_chunks*head_dim], cos/sin: [S, head_dim//2] -> rotated slab."""
    S, W = x.shape
    assert W == n_chunks * head_dim
    half = head_dim // 2
    tq = min(tq, _round_up(S, 8))
    Sp = _round_up(S, tq)
    if Sp != S:
        x = jnp.pad(x, ((0, Sp - S), (0, 0)))
        cos = jnp.pad(cos, ((0, Sp - S), (0, 0)))
        sin = jnp.pad(sin, ((0, Sp - S), (0, 0)))
    out = pl.pallas_call(
        functools.partial(_rope_slab_kernel, n_chunks=n_chunks, head_dim=head_dim),
        out_shape=jax.ShapeDtypeStruct((Sp, W), x.dtype),
        grid=(Sp // tq,),
        in_specs=[
            pl.BlockSpec((tq, W), lambda i: (i, 0)),
            pl.BlockSpec((tq, half), lambda i: (i, 0)),
            pl.BlockSpec((tq, half), lambda i: (i, 0)),
        ],
        out_specs=pl.BlockSpec((tq, W), lambda i: (i, 0)),
        compiler_params=pltpu.CompilerParams(
            dimension_semantics=("parallel",),
            vmem_limit_bytes=_VMEM_LIMIT),
    )(x, cos, sin)
    return out[:S] if Sp != S else out


# ----------------------------------------------------------------------------
# Kernel 3: causal flash attention with folded query heads (MQA / per-KV-group)
#   q rows are position-major folded: row = pos*G + head, all sharing one K/V head.
# ----------------------------------------------------------------------------
def _flash_mqa_kernel(q_ref, qpos_ref, k_ref, v_ref, o_ref,
                      m_ref, l_ref, acc_ref, *, scale, tq, tk):
    qi = pl.program_id(0)
    ki = pl.program_id(1)

    @pl.when(ki == 0)
    def _():
        m_ref[...] = jnp.full_like(m_ref, -jnp.inf)
        l_ref[...] = jnp.zeros_like(l_ref)
        acc_ref[...] = jnp.zeros_like(acc_ref)

    # Skip kv tiles strictly above the causal diagonal for every row of this q tile.
    @pl.when(ki * tk <= qi * tq + (tq - 1))
    def _():
        q = q_ref[...]                             # [tq*G, D]
        k = k_ref[...]                             # [tk, D]
        s = jax.lax.dot_general(
            q, k, (((1,), (1,)), ((), ())),
            preferred_element_type=jnp.float32) * scale       # [tq*G, tk]
        q_pos = qpos_ref[...]                      # [tq*G, 1] absolute positions
        k_pos = ki * tk + jax.lax.broadcasted_iota(jnp.int32, s.shape, 1)
        s = jnp.where(q_pos >= k_pos, s, -1e30)

        m_prev = m_ref[...]
        m_new = jnp.maximum(m_prev, jnp.max(s, axis=-1, keepdims=True))
        alpha = jnp.exp(m_prev - m_new)
        p = jnp.exp(s - m_new)
        l_ref[...] = alpha * l_ref[...] + jnp.sum(p, axis=-1, keepdims=True)
        acc_ref[...] = alpha * acc_ref[...] + jnp.dot(
            p.astype(v_ref.dtype), v_ref[...], preferred_element_type=jnp.float32)
        m_ref[...] = m_new

    @pl.when(ki == pl.num_programs(1) - 1)
    def _():
        o_ref[...] = (acc_ref[...] *
                      pl.reciprocal(l_ref[...], approx=True)).astype(o_ref.dtype)


def pallas_flash_attention(q, k, v, softmax_scale, *, heads, tq=None, tk=256):
    """q: [S*heads, D] (row = pos*heads + head), k/v: [S, D] -> [S*heads, D]."""
    SG, D = q.shape
    S = SG // heads
    assert SG == S * heads and k.shape == (S, D) and v.shape == (S, D)

    if tq is None:                      # keep the folded M tile around 512 rows
        tq = max(8, (512 // heads) // 8 * 8)
    tq = min(tq, _round_up(S, 8))
    tk = min(tk, _round_up(S, 8))
    Sq = _round_up(S, tq)
    Sk = _round_up(S, tk)

    if Sq != S:
        q = jnp.pad(q, ((0, (Sq - S) * heads), (0, 0)))
    if Sk != S:
        k = jnp.pad(k, ((0, Sk - S), (0, 0)))
        v = jnp.pad(v, ((0, Sk - S), (0, 0)))
    # absolute query position per folded row (avoids in-kernel integer division)
    qpos = jnp.repeat(jnp.arange(Sq, dtype=jnp.int32), heads).reshape(Sq * heads, 1)

    kernel = functools.partial(_flash_mqa_kernel,
                               scale=float(softmax_scale), tq=tq, tk=tk)
    out = pl.pallas_call(
        kernel,
        out_shape=jax.ShapeDtypeStruct((Sq * heads, D), q.dtype),
        grid=(Sq // tq, Sk // tk),
        in_specs=[
            pl.BlockSpec((tq * heads, D), lambda i, j: (i, 0)),
            pl.BlockSpec((tq * heads, 1), lambda i, j: (i, 0)),
            pl.BlockSpec((tk, D), lambda i, j: (j, 0)),
            pl.BlockSpec((tk, D), lambda i, j: (j, 0)),
        ],
        out_specs=pl.BlockSpec((tq * heads, D), lambda i, j: (i, 0)),
        scratch_shapes=[
            pltpu.VMEM((tq * heads, 1), jnp.float32),
            pltpu.VMEM((tq * heads, 1), jnp.float32),
            pltpu.VMEM((tq * heads, D), jnp.float32),
        ],
        compiler_params=pltpu.CompilerParams(
            dimension_semantics=("parallel", "arbitrary"),
            vmem_limit_bytes=_VMEM_LIMIT),
    )(q, qpos, k, v)
    return out[:S * heads] if Sq != S else out


# ----------------------------------------------------------------------------
# Module wrapper (mirrors FlashRWAttention.forward, prefill path)
# ----------------------------------------------------------------------------
class FlashRWAttentionPallas:
    def __init__(self, *, n_head, n_head_kv, hidden_size, bias=True,
                 rope_theta=10000.0, key=None, dtype=jnp.bfloat16):
        self.num_heads = n_head
        self.num_heads_kv = n_head_kv
        self.hidden_size = hidden_size
        self.head_size = hidden_size // n_head
        self.rope_theta = rope_theta
        self.softmax_scale = self.head_size ** (-0.5)
        self.dtype = dtype

        qkv_out = self.head_size * (n_head + 2 * n_head_kv)
        k1, k2, k3, k4 = jax.random.split(key, 4)
        self.wqkv = (jax.random.normal(k1, (hidden_size, qkv_out), jnp.float32) * 0.02).astype(dtype)
        self.bqkv = ((jax.random.normal(k2, (qkv_out,), jnp.float32) * 0.02).astype(dtype)
                     if bias else jnp.zeros((qkv_out,), dtype))
        self.wdense = (jax.random.normal(
            k3, (n_head * self.head_size, hidden_size), jnp.float32) * 0.02).astype(dtype)
        self.bdense = ((jax.random.normal(k4, (hidden_size,), jnp.float32) * 0.02).astype(dtype)
                       if bias else jnp.zeros((hidden_size,), dtype))

        if self.num_heads_kv == 1:
            self.kv_head_mapping = jnp.zeros((self.num_heads,), jnp.int32)
        else:
            # Grouped mapping; equals arange(num_heads) when n_head_kv == n_head (the only
            # other case the original module supports) and fixes grouped-KV indexing.
            self.kv_head_mapping = jnp.repeat(
                jnp.arange(self.num_heads_kv, dtype=jnp.int32),
                self.num_heads // self.num_heads_kv)

        # TODO(synk): kv_scales (fp8 KV-cache quantization) treated as identity.

    def forward(self, hidden_states, cos, sin, cu_seqlen_prefill, kv_cache, slots,
                seqlen, hpu_attention_meta=None):
        S = hidden_states.shape[0]
        H, Hkv, D = self.num_heads, self.num_heads_kv, self.head_size

        # QKV projection (tiled Pallas matmul)
        qkv = pallas_linear(hidden_states, self.wqkv, self.bqkv)   # [S, (H+2*Hkv)*D]

        # Rotary embedding on the contiguous q|k slab (one Pallas call, lane-dense)
        qk_rot = pallas_rope_slab(qkv[:, :(H + Hkv) * D], cos, sin,
                                  n_chunks=H + Hkv, head_dim=D)
        q_rot = qk_rot[:, :H * D]                                  # [S, H*D]
        k_rot = qk_rot[:, H * D:]                                  # [S, Hkv*D]
        v_new = qkv[:, (H + Hkv) * D:]                             # [S, Hkv*D]

        # kv_cache.store(key, value, slots)
        # TODO(synk): use buffer donation / input_output_aliases to update the cache in
        # place instead of the functional scatter copy.
        k_cache, v_cache = kv_cache
        k_cache = k_cache.at[slots].set(k_rot.reshape(S, Hkv, D).astype(k_cache.dtype))
        v_cache = v_cache.at[slots].set(v_new.reshape(S, Hkv, D).astype(v_cache.dtype))

        if cu_seqlen_prefill is not None:
            # Prefill: causal flash attention over the freshly computed (rotated) K/V.
            # All query heads sharing a KV head are folded into one kernel call.
            # TODO(synk): multi-sequence varlen prefill (cu_seqlen with >1 sequence) would
            # need per-row sequence ids in the mask; a single contiguous sequence is assumed.
            g = H // Hkv
            outs = []
            for kvh in range(Hkv):
                q_grp = q_rot[:, kvh * g * D:(kvh + 1) * g * D].reshape(S * g, D)
                k_h = k_rot[:, kvh * D:(kvh + 1) * D]
                v_h = v_new[:, kvh * D:(kvh + 1) * D]
                o = pallas_flash_attention(q_grp, k_h, v_h, self.softmax_scale, heads=g)
                outs.append(o.reshape(S, g * D))
            attn_output = outs[0] if Hkv == 1 else jnp.concatenate(outs, axis=-1)
        else:
            # TODO(synk): decode-time paged_attention over the paged KV cache not implemented.
            raise NotImplementedError("only the prefill (cu_seqlen_prefill) path is implemented")

        # dense output projection (tiled Pallas matmul)
        out = pallas_linear(attn_output, self.wdense, self.bdense)
        return out, (k_cache, v_cache)


# ----------------------------------------------------------------------------
# Pure-jnp reference (same dtypes / stage casts) for verification
# ----------------------------------------------------------------------------
def _reference_forward(attn, hidden, cos, sin, slots, kv_cache):
    H, Hkv, D = attn.num_heads, attn.num_heads_kv, attn.head_size
    S = hidden.shape[0]
    f32 = jnp.float32

    qkv = (jnp.dot(hidden, attn.wqkv, preferred_element_type=f32)
           + attn.bqkv.astype(f32)).astype(attn.dtype)
    q = qkv[:, :H * D].reshape(S, H, D)
    k = qkv[:, H * D:(H + Hkv) * D].reshape(S, Hkv, D)
    v = qkv[:, (H + Hkv) * D:].reshape(S, Hkv, D)

    half = D // 2

    def rope(x):
        xf = x.astype(f32)
        x1, x2 = xf[..., :half], xf[..., half:]
        c = cos.astype(f32)[:, None, :]
        s = sin.astype(f32)[:, None, :]
        return jnp.concatenate([x1 * c - x2 * s, x2 * c + x1 * s], -1).astype(attn.dtype)

    q = rope(q)
    k = rope(k)

    k_cache, v_cache = kv_cache
    k_cache = k_cache.at[slots].set(k)
    v_cache = v_cache.at[slots].set(v)

    g = H // Hkv
    mask = jnp.tril(jnp.ones((S, S), dtype=bool))
    outs = []
    for h in range(H):
        kvh = h // g
        s_mat = jnp.dot(q[:, h], k[:, kvh].T,
                        preferred_element_type=f32) * attn.softmax_scale
        s_mat = jnp.where(mask, s_mat, -1e30)
        p = jax.nn.softmax(s_mat, axis=-1)
        outs.append(jnp.dot(p.astype(attn.dtype), v[:, kvh], preferred_element_type=f32))
    attn_out = jnp.stack(outs, axis=1).reshape(S, H * D).astype(attn.dtype)
    out = (jnp.dot(attn_out, attn.wdense, preferred_element_type=f32)
           + attn.bdense.astype(f32)).astype(attn.dtype)
    return out, (k_cache, v_cache)


if __name__ == "__main__":
    # Small config consistent with the module: n_head=4, n_head_kv=1 (multi-query),
    # hidden_size=128 -> head_size=32, seq=16.
    n_head, n_head_kv, hidden_size, rope_theta = 4, 1, 128, 10000.0
    S = 16
    head_size = hidden_size // n_head

    root = jax.random.PRNGKey(0)
    k_params, k_x = jax.random.split(root)

    attn = FlashRWAttentionPallas(
        n_head=n_head, n_head_kv=n_head_kv, hidden_size=hidden_size,
        bias=True, rope_theta=rope_theta, key=k_params, dtype=jnp.bfloat16)

    hidden_states = jax.random.normal(k_x, (S, hidden_size), jnp.float32).astype(jnp.bfloat16)

    # rotary cos/sin tables for positions 0..S-1 (half head_size, rotate-half convention)
    positions = jnp.arange(S, dtype=jnp.float32)
    inv_freq = 1.0 / (rope_theta ** (jnp.arange(0, head_size, 2, dtype=jnp.float32) / head_size))
    freqs = positions[:, None] * inv_freq[None, :]          # [S, head_size//2]
    cos = jnp.cos(freqs)
    sin = jnp.sin(freqs)

    num_slots = 32
    kv_cache = (jnp.zeros((num_slots, n_head_kv, head_size), jnp.bfloat16),
                jnp.zeros((num_slots, n_head_kv, head_size), jnp.bfloat16))
    slots = jnp.arange(S, dtype=jnp.int32)
    cu_seqlen_prefill = jnp.array([0, S], dtype=jnp.int32)

    out, (k_cache, v_cache) = attn.forward(
        hidden_states, cos, sin, cu_seqlen_prefill, kv_cache, slots, seqlen=S)
    jax.block_until_ready(out)
    jax.block_until_ready(k_cache)
    jax.block_until_ready(v_cache)

    ref_out, (ref_kc, ref_vc) = _reference_forward(
        attn, hidden_states, cos, sin, slots, kv_cache)

    assert out.shape == (S, hidden_size)
    np.testing.assert_allclose(np.asarray(out.astype(jnp.float32)),
                               np.asarray(ref_out.astype(jnp.float32)),
                               rtol=5e-2, atol=5e-2)
    np.testing.assert_allclose(np.asarray(k_cache.astype(jnp.float32)),
                               np.asarray(ref_kc.astype(jnp.float32)),
                               rtol=5e-2, atol=5e-2)
    np.testing.assert_allclose(np.asarray(v_cache.astype(jnp.float32)),
                               np.asarray(ref_vc.astype(jnp.float32)),
                               rtol=5e-2, atol=5e-2)
    print("KERNEL_OK")
</pallas_src>

<mosaic_0001>
module attributes {stable_mosaic.version = 11 : i64} {
  func.func @_linear_kernel(%arg0: i32, %arg1: i32, %arg2: i32, %arg3: memref<16x128xbf16, #tpu.memory_space<vmem>>, %arg4: memref<128x256xbf16, #tpu.memory_space<vmem>>, %arg5: memref<1x256xbf16, #tpu.memory_space<vmem>>, %arg6: memref<16x256xbf16, #tpu.memory_space<vmem>>, %arg7: memref<16x256xf32, #tpu.memory_space<vmem>>) attributes {dimension_semantics = [#tpu.dimension_semantics<parallel>, #tpu.dimension_semantics<parallel>, #tpu.dimension_semantics<arbitrary>], iteration_bounds = array<i64: 1, 1, 1>, scalar_prefetch = 0 : i64, scratch_operands = 1 : i64, tpu.core_type = #tpu.core_type<tc>, window_params = [{transform_indices = @transform_0, window_bounds = array<i64: 16, 128>}, {transform_indices = @transform_1, window_bounds = array<i64: 128, 256>}, {transform_indices = @transform_2, window_bounds = array<i64: 1, 256>}, {transform_indices = @transform_3, window_bounds = array<i64: 16, 256>}]} {
    %c0_i32 = arith.constant 0 : i32
    %0 = arith.cmpi eq, %arg2, %c0_i32 : i32
    %1 = arith.extui %0 : i1 to i32
    %c0_i32_0 = arith.constant 0 : i32
    %2 = arith.cmpi ne, %1, %c0_i32_0 : i32
    scf.if %2 {
      %cst_10 = arith.constant 0.000000e+00 : f32
      %12 = vector.broadcast %cst_10 : f32 to vector<16x256xf32>
      %c0_11 = arith.constant 0 : index
      %c0_12 = arith.constant 0 : index
      %13 = vector.load %arg7[%c0_11, %c0_12] : memref<16x256xf32, #tpu.memory_space<vmem>>, vector<16x256xf32>
      tpu.vector_store %arg7[%c0_11, %c0_12], %12 {strides = array<i32>} : memref<16x256xf32, #tpu.memory_space<vmem>>, vector<16x256xf32>,
    } else {
    }
    %c0 = arith.constant 0 : index
    %c0_1 = arith.constant 0 : index
    %3 = vector.load %arg7[%c0, %c0_1] : memref<16x256xf32, #tpu.memory_space<vmem>>, vector<16x256xf32>
    %c0_2 = arith.constant 0 : index
    %c0_3 = arith.constant 0 : index
    %4 = vector.load %arg3[%c0_2, %c0_3] : memref<16x128xbf16, #tpu.memory_space<vmem>>, vector<16x128xbf16>
    %c0_4 = arith.constant 0 : index
    %c0_5 = arith.constant 0 : index
    %5 = vector.load %arg4[%c0_4, %c0_5] : memref<128x256xbf16, #tpu.memory_space<vmem>>, vector<128x256xbf16>
    %cst = arith.constant dense<0.000000e+00> : vector<16x256xf32>
    %6 = tpu.matmul %4, %5, %cst {dimension_numbers = #tpu.dot_dimension_numbers<[1], [0], [0], [1], [0, 0, 1, 1], [], []>} : vector<16x128xbf16>, vector<128x256xbf16>, vector<16x256xf32> -> vector<16x256xf32>
    %7 = arith.addf %3, %6 : vector<16x256xf32>
    %c0_6 = arith.constant 0 : index
    %c0_7 = arith.constant 0 : index
    %8 = vector.load %arg7[%c0_6, %c0_7] : memref<16x256xf32, #tpu.memory_space<vmem>>, vector<16x256xf32>
    tpu.vector_store %arg7[%c0_6, %c0_7], %7 {strides = array<i32>} : memref<16x256xf32, #tpu.memory_space<vmem>>, vector<16x256xf32>,
    %c0_i32_8 = arith.constant 0 : i32
    %9 = arith.cmpi eq, %arg2, %c0_i32_8 : i32
    %10 = arith.extui %9 : i1 to i32
    %c0_i32_9 = arith.constant 0 : i32
    %11 = arith.cmpi ne, %10, %c0_i32_9 : i32
    scf.if %11 {
      %c0_10 = arith.constant 0 : index
      %c0_11 = arith.constant 0 : index
      %12 = vector.load %arg7[%c0_10, %c0_11] : memref<16x256xf32, #tpu.memory_space<vmem>>, vector<16x256xf32>
      %c0_12 = arith.constant 0 : index
      %c0_13 = arith.constant 0 : index
      %13 = vector.load %arg5[%c0_12, %c0_13] : memref<1x256xbf16, #tpu.memory_space<vmem>>, vector<1x256xbf16>
      %14 = arith.extf %13 : vector<1x256xbf16> to vector<1x256xf32>
      %15 = vector.broadcast %14 : vector<1x256xf32> to vector<16x256xf32>
      %16 = arith.addf %12, %15 : vector<16x256xf32>
      %17 = arith.truncf %16 : vector<16x256xf32> to vector<16x256xbf16>
      %c0_14 = arith.constant 0 : index
      %c0_15 = arith.constant 0 : index
      %18 = vector.load %arg6[%c0_14, %c0_15] : memref<16x256xbf16, #tpu.memory_space<vmem>>, vector<16x256xbf16>
      tpu.vector_store %arg6[%c0_14, %c0_15], %17 {strides = array<i32>} : memref<16x256xbf16, #tpu.memory_space<vmem>>, vector<16x256xbf16>,
    } else {
    }
    return
  }
  func.func @transform_0(%arg0: i32, %arg1: i32, %arg2: i32) -> (i32, i32) {
    %c0_i32 = arith.constant 0 : i32
    return %arg0, %arg2 : i32, i32
  }
  func.func @transform_1(%arg0: i32, %arg1: i32, %arg2: i32) -> (i32, i32) {
    %c0_i32 = arith.constant 0 : i32
    return %arg2, %arg1 : i32, i32
  }
  func.func @transform_2(%arg0: i32, %arg1: i32, %arg2: i32) -> (i32, i32) {
    %c0_i32 = arith.constant 0 : i32
    %c0_i32_0 = arith.constant 0 : i32
    return %c0_i32, %arg1 : i32, i32
  }
  func.func @transform_3(%arg0: i32, %arg1: i32, %arg2: i32) -> (i32, i32) {
    %c0_i32 = arith.constant 0 : i32
    return %arg0, %arg1 : i32, i32
  }
}

</mosaic_0001>

<llo_original>
// kernel: tpu_custom_call.1
$region0: #{tpu_custom_call.1}
  #allocation0 [shape = 'u32[]', space=smem, size = 0x4, offset = 0x4, fixed_abs, tag = 'smem constant byte address 0x4 - core index']
  #allocation1 [shape = 'u32[144,128]{1,0:T(1,128)}', space=vmem, size = 0x12000, scoped, tag = 'internal scratch']
  #allocation2 [shape = 'f32[16,256]{1,0:T(8,128)}', space=vmem, size = 0x4000, scoped, tag = 'scratch operand']
  %s0 = inlined_call_operand.hbm [shape: bf16[16,128], index: 0, kind: input, shape index: {}]
  %s1 = inlined_call_operand.hbm [shape: bf16[128,256], index: 1, kind: input, shape index: {}]
  %s2 = inlined_call_operand.vmem [shape: bf16[1,256], index: 2, kind: input, shape index: {}]
  %s3 = inlined_call_operand.hbm [shape: bf16[16,256], index: 3, kind: output, shape index: {}]
  %s4 = sld [smem:[#allocation0]]
  $region38: #{tpu_custom_call.1} parent=0
    _
  %s6 = ssub.s32 1, %s4
  %s7 = scalar_select 0, %s6, %s4
  $region1: #{tpu_custom_call.1} parent=0
    #allocation3 [shape = 'u8[4096]{0}', space=vmem, size = 0x1000, scoped, tag = 'input window, operand 0, single buffered']
    #allocation4 [shape = 's32[1]{0}', space=sflag, size = 0x4, scoped, tag = 'scoped memory for tpu_custom_call.1']
    #allocation5 [shape = 's32[1]{0}', space=sflag, size = 0x4, scoped, tag = 'scoped memory for tpu_custom_call.1']
    #allocation6 [shape = 'u8[65536]{0}', space=vmem, size = 0x10000, scoped, tag = 'input window, operand 1, single buffered']
    #allocation7 [shape = 's32[1]{0}', space=sflag, size = 0x4, scoped, tag = 'scoped memory for tpu_custom_call.1']
    #allocation8 [shape = 'u8[8192]{0}', space=vmem, size = 0x2000, scoped, tag = 'output window, operand 0, single buffered']
    %8 = vsyncpa [#allocation4], 0
    %9 = vsyncpa [#allocation7], 0
    %10 = vsyncpa [#allocation5], 0
    // Predicated region
    $region2: #{tpu_custom_call.1} parent=1 // pred_check
      _
    $region3: #{tpu_custom_call.1} parent=1 // pred_check_branch
      %12 = sbr.rel (0) target = $region5
    $region4: #{tpu_custom_call.1} parent=1 // pred_region
      %s14 = ssub.s32 128, 128
      %15 = vsyncadd [#allocation4], %s14
      %s16 = sshll.u32 [#allocation3], 4
      %s17 = int_to_ptr.vmem [resolvable:$true] %s16
      %22 = dma.hbm_to_vmem [thread:$0]  %s0, 128, %s17, [#allocation4], 64, 64, 4
    $region5: #{tpu_custom_call.1} parent=1 // pred_fallthru
      _
    // Predicated region
    $region6: #{tpu_custom_call.1} parent=1 // pred_check
      _
    $region7: #{tpu_custom_call.1} parent=1 // pred_check_branch
      %24 = sbr.rel (0) target = $region9
    $region8: #{tpu_custom_call.1} parent=1 // pred_region
      %s26 = ssub.s32 2048, 2048
      %27 = vsyncadd [#allocation7], %s26
      %s28 = sshll.u32 [#allocation6], 4
      %s29 = int_to_ptr.vmem [resolvable:$true] %s28
      %34 = dma.hbm_to_vmem [thread:$0]  %s1, 2048, %s29, [#allocation7], 128, 128, 8
    $region9: #{tpu_custom_call.1} parent=1 // pred_fallthru
      _
    // Predicated region
    $region10: #{tpu_custom_call.1} parent=1 // pred_check
      _
    $region11: #{tpu_custom_call.1} parent=1 // pred_check_branch
      %36 = sbr.rel (0) target = $region13
    $region12: #{tpu_custom_call.1} parent=1 // pred_region
      _
    $region13: #{tpu_custom_call.1} parent=1 // pred_fallthru
      _
    // Predicated region
    $region14: #{tpu_custom_call.1} parent=1 // pred_check
      _
    $region15: #{tpu_custom_call.1} parent=1 // pred_check_branch
      %38 = sbr.rel (0) target = $region17
    $region16: #{tpu_custom_call.1} parent=1 // pred_region
      %39 = dma.done [#allocation4], 128
    $region17: #{tpu_custom_call.1} parent=1 // pred_fallthru
      _
    // Predicated region
    $region18: #{tpu_custom_call.1} parent=1 // pred_check
      _
    $region19: #{tpu_custom_call.1} parent=1 // pred_check_branch
      %41 = sbr.rel (0) target = $region21
    $region20: #{tpu_custom_call.1} parent=1 // pred_region
      %42 = dma.done [#allocation7], 2048
    $region21: #{tpu_custom_call.1} parent=1 // pred_fallthru
      _
    %p44 = scmp.eq.s32.totalorder 0, 0
    // Predicated region
    $region22: #{tpu_custom_call.1} parent=1 // pred_check
      %p45 = pneg %p44
    $region23: #{tpu_custom_call.1} parent=1 // pred_check_branch
      %47 = sbr.rel (%p45) target = $region25
    $region24: #{tpu_custom_call.1} parent=1 // pred_region
      %48 = vst [vmem:[#allocation2] sm:$0xff] 0.0
      %49 = vst [vmem:[#allocation2 + $0x8] sm:$0xff] 0.0
      %50 = vst [vmem:[#allocation2 + $0x10] sm:$0xff] 0.0
      %51 = vst [vmem:[#allocation2 + $0x18] sm:$0xff] 0.0
    $region25: #{tpu_custom_call.1} parent=1 // pred_fallthru
      _
    %v52 = vld [vmem:[#allocation2] sm:$0xff]
    %v53 = vld [vmem:[#allocation2 + $0x8] sm:$0xff]
    %v54 = vld [vmem:[#allocation2 + $0x10] sm:$0xff]
    %v55 = vld [vmem:[#allocation2 + $0x18] sm:$0xff]
    %v56 = vld [vmem:[#allocation3] sm:$0xf]
    %v57 = vld [vmem:[#allocation3 + $0x4] sm:$0xf]
    %v58 = vld [vmem:[#allocation6] sm:$0xff]
    %v59 = vld [vmem:[#allocation6 + $0x8] sm:$0xff]
    %v60 = vld [vmem:[#allocation6 + $0x10] sm:$0xff]
    %v61 = vld [vmem:[#allocation6 + $0x18] sm:$0xff]
    %v62 = vld [vmem:[#allocation6 + $0x20] sm:$0xff]
    %v63 = vld [vmem:[#allocation6 + $0x28] sm:$0xff]
    %v64 = vld [vmem:[#allocation6 + $0x30] sm:$0xff]
    %v65 = vld [vmem:[#allocation6 + $0x38] sm:$0xff]
    %v66 = vld [vmem:[#allocation6 + $0x40] sm:$0xff]
    %v67 = vld [vmem:[#allocation6 + $0x48] sm:$0xff]
    %v68 = vld [vmem:[#allocation6 + $0x50] sm:$0xff]
    %v69 = vld [vmem:[#allocation6 + $0x58] sm:$0xff]
    %v70 = vld [vmem:[#allocation6 + $0x60] sm:$0xff]
    %v71 = vld [vmem:[#allocation6 + $0x68] sm:$0xff]
    %v72 = vld [vmem:[#allocation6 + $0x70] sm:$0xff]
    %v73 = vld [vmem:[#allocation6 + $0x78] sm:$0xff]
    %v76 = vunpack.c.l.b16 %v56
    %v77 = vunpack.c.l.b16 %v57
    %v78 = vpack.c.b16 %v77, %v76
    %v96 = vunpack.c.l.b16 %v58
    %v97 = vunpack.c.h.b16 %v58
    %v98 = vunpack.c.l.b16 %v59
    %v99 = vunpack.c.h.b16 %v59
    %v100 = vunpack.c.l.b16 %v60
    %v101 = vunpack.c.h.b16 %v60
    %v102 = vunpack.c.l.b16 %v61
    %v103 = vunpack.c.h.b16 %v61
    %v104 = vunpack.c.l.b16 %v62
    %v105 = vunpack.c.h.b16 %v62
    %v106 = vunpack.c.l.b16 %v63
    %v107 = vunpack.c.h.b16 %v63
    %v108 = vunpack.c.l.b16 %v64
    %v109 = vunpack.c.h.b16 %v64
    %v110 = vunpack.c.l.b16 %v65
    %v111 = vunpack.c.h.b16 %v65
    %v112 = vunpack.c.l.b16 %v66
    %v113 = vunpack.c.h.b16 %v66
    %v114 = vunpack.c.l.b16 %v67
    %v115 = vunpack.c.h.b16 %v67
    %v116 = vunpack.c.l.b16 %v68
    %v117 = vunpack.c.h.b16 %v68
    %v118 = vunpack.c.l.b16 %v69
    %v119 = vunpack.c.h.b16 %v69
    %v120 = vunpack.c.l.b16 %v70
    %v121 = vunpack.c.h.b16 %v70
    %v122 = vunpack.c.l.b16 %v71
    %v123 = vunpack.c.h.b16 %v71
    %v124 = vunpack.c.l.b16 %v72
    %v125 = vunpack.c.h.b16 %v72
    %v126 = vunpack.c.l.b16 %v73
    %v127 = vunpack.c.h.b16 %v73
    %v128 = vpack.c.b16 %v98, %v96
    %v129 = vpack.c.b16 %v99, %v97
    %v130 = vpack.c.b16 %v102, %v100
    %v131 = vpack.c.b16 %v103, %v101
    %v132 = vpack.c.b16 %v106, %v104
    %v133 = vpack.c.b16 %v107, %v105
    %v134 = vpack.c.b16 %v110, %v108
    %v135 = vpack.c.b16 %v111, %v109
    %v136 = vpack.c.b16 %v114, %v112
    %v137 = vpack.c.b16 %v115, %v113
    %v138 = vpack.c.b16 %v118, %v116
    %v139 = vpack.c.b16 %v119, %v117
    %v140 = vpack.c.b16 %v122, %v120
    %v141 = vpack.c.b16 %v123, %v121
    %v142 = vpack.c.b16 %v126, %v124
    %v143 = vpack.c.b16 %v127, %v125
    %160 = vmatprep.subr.bf16.mxu0 %v143
    %161 = vmatpush1.bf16.msra.mxu0 %v142
    %162 = vmatprep.subr.bf16.mxu0 %v141
    %163 = vmatpush1.bf16.msra.mxu0 %v140
    %164 = vmatprep.subr.bf16.mxu0 %v139
    %165 = vmatpush1.bf16.msra.mxu0 %v138
    %166 = vmatprep.subr.bf16.mxu0 %v137
    %167 = vmatpush1.bf16.msra.mxu0 %v136
    %168 = vmatprep.subr.bf16.mxu0 %v135
    %169 = vmatpush1.bf16.msra.mxu0 %v134
    %170 = vmatprep.subr.bf16.mxu0 %v133
    %171 = vmatpush1.bf16.msra.mxu0 %v132
    %172 = vmatprep.subr.bf16.mxu0 %v131
    %173 = vmatpush1.bf16.msra.mxu0 %v130
    %174 = vmatprep.subr.bf16.mxu0 %v129
    %175 = vmatpush1.bf16.msra.mxu0 %v128
    %176 = vmatprep.subr.bf16.mxu0 0
    %177 = vmatpush2.bf16.msra.mxu0 0
    %178 = vmatprep.subr.bf16.mxu0 0
    %179 = vmatpush2.bf16.msra.mxu0 0
    %180 = vmatprep.subr.bf16.mxu0 0
    %181 = vmatpush2.bf16.msra.mxu0 0
    %182 = vmatprep.subr.bf16.mxu0 0
    %183 = vmatpush2.bf16.msra.mxu0 0
    %184 = vmatprep.subr.bf16.mxu0 0
    %185 = vmatpush2.bf16.msra.mxu0 0
    %186 = vmatprep.subr.bf16.mxu0 0
    %187 = vmatpush2.bf16.msra.mxu0 0
    %188 = vmatprep.subr.bf16.mxu0 0
    %189 = vmatpush2.bf16.msra.mxu0 0
    %190 = vmatprep.subr.bf16.mxu0 0
    %191 = vmatpush2.bf16.msra.mxu0 0
    %192 = vmatprep.mubr.bf16.mxu0 0
    %193 = vmatmul.mubr.bf16.gmra.mxu0 %v78
    %v194 = vpop.f32.mrf.mxu0
    %v195 = vadd.f32 0.0, %v194
    %v196 = vpop.f32.mrf.mxu0
    %v197 = vadd.f32 0.0, %v196
    %v198 = vpop.f32.mrf.mxu0
    %v199 = vadd.f32 0.0, %v198
    %v200 = vpop.f32.mrf.mxu0
    %v201 = vadd.f32 0.0, %v200
    %202 = vdwg.mxu0
    %v203 = vadd.f32 %v52, %v195
    %v204 = vadd.f32 %v53, %v197
    %v205 = vadd.f32 %v54, %v199
    %v206 = vadd.f32 %v55, %v201
    %207 = vst [vmem:[#allocation2] sm:$0xff] %v203
    %208 = vst [vmem:[#allocation2 + $0x8] sm:$0xff] %v204
    %209 = vst [vmem:[#allocation2 + $0x10] sm:$0xff] %v205
    %210 = vst [vmem:[#allocation2 + $0x18] sm:$0xff] %v206
    // Predicated region
    $region26: #{tpu_custom_call.1} parent=1 // pred_check
      %p211 = pneg %p44
    $region27: #{tpu_custom_call.1} parent=1 // pred_check_branch
      %213 = sbr.rel (%p211) target = $region29
    $region28: #{tpu_custom_call.1} parent=1 // pred_region
      %v214 = vld [vmem:[#allocation2] sm:$0xff]
      %v215 = vld [vmem:[#allocation2 + $0x8] sm:$0xff]
      %v216 = vld [vmem:[#allocation2 + $0x10] sm:$0xff]
      %v217 = vld [vmem:[#allocation2 + $0x18] sm:$0xff]
      %v218 = vld [vmem:[%s2] sm:$0x3]
      %v219 = vunpack.c.l.bf16 %v218
      %v221 = vlaneseq
      %v222 = vshrl.u32 %v221, 7
      %v223 = vsub.s32 0, %v222
      %v224 = vrot.slane %v219, %v223
      %v225 = vlaneseq
      %v226 = vshrl.u32 %v225, 7
      %v227 = vsub.s32 2, %v226
      %v228 = vrot.slane %v219, %v227
      %v231 = vlaneseq
      %v232 = vshrl.u32 %v231, 7
      %v233 = vsub.s32 0, %v232
      %v234 = vrot.slane %v224, %v233
      %v235 = vlaneseq
      %v236 = vshrl.u32 %v235, 7
      %v237 = vsub.s32 0, %v236
      %v238 = vrot.slane %v228, %v237
      %v239 = vadd.f32 %v214, %v234
      %v240 = vadd.f32 %v215, %v238
      %v241 = vadd.f32 %v216, %v234
      %v242 = vadd.f32 %v217, %v238
      %v243 = vpack.c.bf16 %v241, %v239
      %v244 = vpack.c.bf16 %v242, %v240
      %v247 = vunpack.c.l.b16 %v243
      %v248 = vunpack.c.l.b16 %v244
      %v249 = vunpack.c.h.b16 %v243
      %v250 = vunpack.c.h.b16 %v244
      %v251 = vpack.c.b16 %v248, %v247
      %v252 = vpack.c.b16 %v250, %v249
      %255 = vst [vmem:[#allocation8] sm:$0xff] %v251
      %256 = vst [vmem:[#allocation8 + $0x8] sm:$0xff] %v252
    $region29: #{tpu_custom_call.1} parent=1 // pred_fallthru
      _
    // Predicated region
    $region30: #{tpu_custom_call.1} parent=1 // pred_check
      _
    $region31: #{tpu_custom_call.1} parent=1 // pred_check_branch
      %258 = sbr.rel (0) target = $region33
    $region32: #{tpu_custom_call.1} parent=1 // pred_region
      %s260 = ssub.s32 256, 256
      %261 = vsyncadd [#allocation5], %s260
      %s262 = sshll.u32 [#allocation8], 4
      %s263 = int_to_ptr.vmem [resolvable:$true] %s262
      %268 = dma.vmem_to_hbm [thread:$0]  %s263, 256, %s3, [#allocation5], 128, 128, 8
    $region33: #{tpu_custom_call.1} parent=1 // pred_fallthru
      _
    // Predicated region
    $region34: #{tpu_custom_call.1} parent=1 // pred_check
      _
    $region35: #{tpu_custom_call.1} parent=1 // pred_check_branch
      %270 = sbr.rel (0) target = $region37
    $region36: #{tpu_custom_call.1} parent=1 // pred_region
      %271 = dma.done [#allocation5], 256
    $region37: #{tpu_custom_call.1} parent=1 // pred_fallthru
      _
    %272 = vsyncpa [#allocation4], 1
    %273 = vsyncpa [#allocation7], 1
    %274 = vsyncpa [#allocation5], 1

</llo_original>
